<compile_context>
chip_gen: v6e
topology: v6e:2x2x1
jax: 0.10.0
libtpu: 0.0.40
codegen_flags: <defaults>
</compile_context>

<pallas_src>
import functools

import jax
import jax.numpy as jnp
from jax.experimental import pallas as pl
from jax.experimental.pallas import tpu as pltpu

_LANE = 128
_SUB = 16  # multiple of 16 so bf16 blocks are legal too


def _round_up(x, m):
    return ((x + m - 1) // m) * m


def _bm25_kernel(*refs, denom_c, without_idf, tile_rows, tile_cols,
                 nrows, ncols, mask_rows, mask_cols):
    if without_idf:
        qtf_ref, out_ref = refs
        idf_ref = None
    else:
        qtf_ref, idf_ref, out_ref = refs

    # Output block (1, tile_cols) is resident across the row-reduction axis;
    # zero it on the first row step of each column block.
    @pl.when(pl.program_id(1) == 0)
    def _():
        out_ref[...] = jnp.zeros_like(out_ref)

    qtf = qtf_ref[...].astype(jnp.float32)
    # (k1 + 1) is hoisted to the wrapper; denom_c = k1 * (1 - b + b*3/3).
    scores = qtf / (qtf + denom_c)
    if not without_idf:  # static trace-time flag
        scores = idf_ref[...].astype(jnp.float32) * scores

    # Ragged-tail masking (trace-time specialized: only emitted when needed).
    if mask_rows or mask_cols:
        mask = None
        if mask_rows:
            r0 = pl.program_id(1) * tile_rows
            rid = r0 + jax.lax.broadcasted_iota(
                jnp.int32, (tile_rows, tile_cols), 0)
            mask = rid < nrows
        if mask_cols:
            c0 = pl.program_id(0) * tile_cols
            cid = c0 + jax.lax.broadcasted_iota(
                jnp.int32, (tile_rows, tile_cols), 1)
            cmask = cid < ncols
            mask = cmask if mask is None else (mask & cmask)
        scores = jnp.where(mask, scores, 0.0)

    # Reduce only the sublane (row) axis per tile; lanes stay dense.  The
    # single cross-lane reduction happens once in the wrapper.
    out_ref[...] += jnp.sum(scores, axis=0, keepdims=True)


def _vmem_budget():
    """Generation-aware scoped-VMEM ceiling (bytes)."""
    try:
        info = pltpu.get_tpu_info()
        cap = getattr(info, "vmem_capacity_bytes", None)
        if cap is not None and cap <= 80 * 1024 * 1024:   # v7x-class (64 MiB)
            return 32 * 1024 * 1024
    except Exception:
        pass
    return 48 * 1024 * 1024                               # v5e / v6e (128 MiB)


def bm25_forward(qtf, idf, d, k1, b, without_idf=False):
    """Pallas equivalent of bm25.forward(qtf, idf, d, without_idf)."""
    # `d` appears in the PyTorch signature but is never used in forward()
    # (the expression is `b * 3 / 3`, not something involving d).
    del d
    qtf = jnp.asarray(qtf)
    R, C = qtf.shape
    itemsize = jnp.dtype(qtf.dtype).itemsize

    k1f, bf = float(k1), float(b)
    denom_c = k1f * (1.0 - bf + bf * 3.0 / 3.0)   # algebraically == k1

    # ---- tile selection: big, lane-dense tiles (~4 MiB of qtf each).  The
    # column tile is capped near half the rounded width so the parallel axis
    # has >=2 blocks whenever C > 128 (both v7x TensorCores active).
    target_bytes = 4 * 1024 * 1024
    c128 = _round_up(C, _LANE)
    tile_cols = max(_LANE, _round_up(pl.cdiv(c128, 2), _LANE))
    tile_cols = min(tile_cols, max(_LANE,
                                   (target_bytes // (_SUB * itemsize))
                                   // _LANE * _LANE))
    tile_rows = max(_SUB,
                    (target_bytes // (tile_cols * itemsize)) // _SUB * _SUB)
    tile_rows = min(tile_rows, _round_up(R, _SUB))

    col_blocks = pl.cdiv(C, tile_cols)
    row_blocks = pl.cdiv(R, tile_rows)
    grid = (col_blocks, row_blocks)               # (parallel, reduction)

    args = [qtf]
    in_specs = [pl.BlockSpec((tile_rows, tile_cols), lambda j, i: (i, j))]
    bytes_accessed = qtf.size * itemsize
    if not without_idf:
        idf = jnp.asarray(idf)
        args.append(idf)
        in_specs.append(pl.BlockSpec((tile_rows, tile_cols),
                                     lambda j, i: (i, j)))
        bytes_accessed += idf.size * jnp.dtype(idf.dtype).itemsize
    out_cols = col_blocks * tile_cols
    bytes_accessed += out_cols * 4

    # VMEM limit: double-buffered inputs + tiny output, inside the per-chip cap.
    need = 2 * sum(tile_rows * tile_cols * jnp.dtype(a.dtype).itemsize
                   for a in args) + 2 * out_cols * 4 + (1 << 20)
    vmem_limit = min(max(need, 16 * 1024 * 1024), _vmem_budget())

    kernel = functools.partial(
        _bm25_kernel,
        denom_c=denom_c, without_idf=without_idf,
        tile_rows=tile_rows, tile_cols=tile_cols,
        nrows=R, ncols=C,
        mask_rows=(R % tile_rows != 0),
        mask_cols=(C % tile_cols != 0))

    partial_sums = pl.pallas_call(
        kernel,
        out_shape=jax.ShapeDtypeStruct((1, out_cols), jnp.float32),
        grid_spec=pltpu.PrefetchScalarGridSpec(
            num_scalar_prefetch=0,
            grid=grid,
            in_specs=in_specs,
            out_specs=pl.BlockSpec((1, tile_cols), lambda j, i: (0, j)),
        ),
        compiler_params=pltpu.CompilerParams(
            dimension_semantics=("parallel", "arbitrary"),
            vmem_limit_bytes=int(vmem_limit),
        ),
        cost_estimate=pl.CostEstimate(
            flops=int((4 if without_idf else 5) * R * C),
            transcendentals=0,
            bytes_accessed=int(bytes_accessed),
        ),
    )(*args)

    # Final cross-lane reduce once, then apply the hoisted (k1 + 1) factor.
    return (k1f + 1.0) * jnp.sum(partial_sums)


def _reference(qtf, idf, k1, b, without_idf):
    qtf = jnp.asarray(qtf, jnp.float32)
    num = qtf * (k1 + 1.0)
    denom = qtf + k1 * (1.0 - b + b * 3.0 / 3.0)
    if without_idf:
        scores = num / denom
    else:
        scores = jnp.asarray(idf, jnp.float32) * (num / denom)
    return jnp.sum(scores)


if __name__ == "__main__":
    key = jax.random.PRNGKey(0)
    k1, b = 1.2, 0.75  # module parameters (stored as tensors in __init__)

    # --- small aligned shape, both paths ---
    kq, ki = jax.random.split(key)
    R, C = 16, 128
    qtf = jax.random.uniform(kq, (R, C), jnp.float32, minval=0.0, maxval=5.0)
    idf = jax.random.uniform(ki, (R, C), jnp.float32, minval=0.0, maxval=3.0)
    d = jnp.zeros((R, C), jnp.float32)  # signature parity only; unused

    out = bm25_forward(qtf, idf, d, k1, b, without_idf=False)
    jax.block_until_ready(out)
    ref = _reference(qtf, idf, k1, b, False)
    assert jnp.allclose(out, ref, rtol=1e-4, atol=1e-3), (out, ref)

    out2 = bm25_forward(qtf, idf, d, k1, b, without_idf=True)
    jax.block_until_ready(out2)
    ref2 = _reference(qtf, idf, k1, b, True)
    assert jnp.allclose(out2, ref2, rtol=1e-4, atol=1e-3), (out2, ref2)

    # --- ragged shape: exercises in-kernel row & column tail masking and a
    #     2-block parallel column axis ---
    kq2, ki2 = jax.random.split(ki)
    R2, C2 = 1037, 300
    qtf2 = jax.random.uniform(kq2, (R2, C2), jnp.float32, minval=0.0, maxval=5.0)
    idf2 = jax.random.uniform(ki2, (R2, C2), jnp.float32, minval=0.0, maxval=3.0)
    d2 = jnp.zeros((R2, C2), jnp.float32)

    out3 = bm25_forward(qtf2, idf2, d2, k1, b, without_idf=False)
    jax.block_until_ready(out3)
    ref3 = _reference(qtf2, idf2, k1, b, False)
    assert jnp.allclose(out3, ref3, rtol=1e-4, atol=1e-2), (out3, ref3)

    out4 = bm25_forward(qtf2, idf2, d2, k1, b, without_idf=True)
    jax.block_until_ready(out4)
    ref4 = _reference(qtf2, idf2, k1, b, True)
    assert jnp.allclose(out4, ref4, rtol=1e-4, atol=1e-2), (out4, ref4)

    # --- bf16 inputs stream as bf16 (no wrapper cast), upcast in-kernel ---
    kq3, ki3 = jax.random.split(ki2)
    R3, C3 = 64, 256
    qtf3 = jax.random.uniform(kq3, (R3, C3), jnp.float32,
                              minval=0.0, maxval=5.0).astype(jnp.bfloat16)
    idf3 = jax.random.uniform(ki3, (R3, C3), jnp.float32,
                              minval=0.0, maxval=3.0).astype(jnp.bfloat16)
    d3 = jnp.zeros((R3, C3), jnp.float32)

    out5 = bm25_forward(qtf3, idf3, d3, k1, b, without_idf=False)
    jax.block_until_ready(out5)
    ref5 = _reference(qtf3, idf3, k1, b, False)   # ref from same bf16 values
    assert jnp.allclose(out5, ref5, rtol=1e-2, atol=1e-1), (out5, ref5)

    print("KERNEL_OK")
</pallas_src>

<mosaic_0001>
module attributes {stable_mosaic.version = 11 : i64} {
  func.func @_bm25_kernel(%arg0: i32, %arg1: i32, %arg2: memref<16x128xf32, #tpu.memory_space<vmem>>, %arg3: memref<16x128xf32, #tpu.memory_space<vmem>>, %arg4: memref<1x128xf32, #tpu.memory_space<vmem>>) attributes {dimension_semantics = [#tpu.dimension_semantics<parallel>, #tpu.dimension_semantics<arbitrary>], iteration_bounds = array<i64: 1, 1>, scalar_prefetch = 0 : i64, scratch_operands = 0 : i64, tpu.core_type = #tpu.core_type<tc>, window_params = [{transform_indices = @transform_0, window_bounds = array<i64: 16, 128>}, {transform_indices = @transform_1, window_bounds = array<i64: 16, 128>}, {transform_indices = @transform_2, window_bounds = array<i64: 1, 128>}]} {
    %c0_i32 = arith.constant 0 : i32
    %0 = arith.cmpi eq, %arg1, %c0_i32 : i32
    %1 = arith.extui %0 : i1 to i32
    %c0_i32_0 = arith.constant 0 : i32
    %2 = arith.cmpi ne, %1, %c0_i32_0 : i32
    scf.if %2 {
      %cst_9 = arith.constant 0.000000e+00 : f32
      %14 = vector.broadcast %cst_9 : f32 to vector<1x128xf32>
      %c0_10 = arith.constant 0 : index
      %c0_11 = arith.constant 0 : index
      %15 = vector.load %arg4[%c0_10, %c0_11] : memref<1x128xf32, #tpu.memory_space<vmem>>, vector<1x128xf32>
      tpu.vector_store %arg4[%c0_10, %c0_11], %14 {strides = array<i32>} : memref<1x128xf32, #tpu.memory_space<vmem>>, vector<1x128xf32>,
    } else {
    }
    %c0 = arith.constant 0 : index
    %c0_1 = arith.constant 0 : index
    %3 = vector.load %arg2[%c0, %c0_1] : memref<16x128xf32, #tpu.memory_space<vmem>>, vector<16x128xf32>
    %cst = arith.constant 1.200000e+00 : f32
    %4 = vector.broadcast %cst : f32 to vector<16x128xf32>
    %5 = arith.addf %3, %4 : vector<16x128xf32>
    %6 = arith.divf %3, %5 : vector<16x128xf32>
    %c0_2 = arith.constant 0 : index
    %c0_3 = arith.constant 0 : index
    %7 = vector.load %arg3[%c0_2, %c0_3] : memref<16x128xf32, #tpu.memory_space<vmem>>, vector<16x128xf32>
    %8 = arith.mulf %7, %6 : vector<16x128xf32>
    %c0_4 = arith.constant 0 : index
    %c0_5 = arith.constant 0 : index
    %9 = vector.load %arg4[%c0_4, %c0_5] : memref<1x128xf32, #tpu.memory_space<vmem>>, vector<1x128xf32>
    %cst_6 = arith.constant dense<0.000000e+00> : vector<128xf32>
    %10 = vector.multi_reduction <add>, %8, %cst_6 [0] : vector<16x128xf32> to vector<128xf32>
    %11 = vector.shape_cast %10 : vector<128xf32> to vector<1x128xf32>
    %12 = arith.addf %9, %11 : vector<1x128xf32>
    %c0_7 = arith.constant 0 : index
    %c0_8 = arith.constant 0 : index
    %13 = vector.load %arg4[%c0_7, %c0_8] : memref<1x128xf32, #tpu.memory_space<vmem>>, vector<1x128xf32>
    tpu.vector_store %arg4[%c0_7, %c0_8], %12 {strides = array<i32>} : memref<1x128xf32, #tpu.memory_space<vmem>>, vector<1x128xf32>,
    return
  }
  func.func @transform_0(%arg0: i32, %arg1: i32) -> (i32, i32) {
    %c0_i32 = arith.constant 0 : i32
    return %arg1, %arg0 : i32, i32
  }
  func.func @transform_1(%arg0: i32, %arg1: i32) -> (i32, i32) {
    %c0_i32 = arith.constant 0 : i32
    return %arg1, %arg0 : i32, i32
  }
  func.func @transform_2(%arg0: i32, %arg1: i32) -> (i32, i32) {
    %c0_i32 = arith.constant 0 : i32
    %c0_i32_0 = arith.constant 0 : i32
    return %c0_i32, %arg0 : i32, i32
  }
}

</mosaic_0001>

<llo_original>
// kernel: tpu_custom_call.1
$region0: #{tpu_custom_call.1}
  #allocation0 [shape = 'u32[]', space=smem, size = 0x4, offset = 0x4, fixed_abs, tag = 'smem constant byte address 0x4 - core index']
  #allocation1 [shape = 'u32[144,128]{1,0:T(1,128)}', space=vmem, size = 0x12000, scoped, tag = 'internal scratch']
  %s0 = inlined_call_operand.hbm [shape: f32[16,128], index: 0, kind: input, shape index: {}]
  %s1 = inlined_call_operand.hbm [shape: f32[16,128], index: 1, kind: input, shape index: {}]
  %s2 = inlined_call_operand.hbm [shape: f32[1,128], index: 2, kind: output, shape index: {}]
  %s3 = sld [smem:[#allocation0]]
  $region30: #{tpu_custom_call.1} parent=0
    _
  %s5 = ssub.s32 1, %s3
  %s6 = scalar_select 0, %s5, %s3
  $region1: #{tpu_custom_call.1} parent=0
    #allocation2 [shape = 'u8[8192]{0}', space=vmem, size = 0x2000, scoped, tag = 'input window, operand 0, single buffered']
    #allocation3 [shape = 's32[1]{0}', space=sflag, size = 0x4, scoped, tag = 'scoped memory for tpu_custom_call.1']
    #allocation4 [shape = 's32[1]{0}', space=sflag, size = 0x4, scoped, tag = 'scoped memory for tpu_custom_call.1']
    #allocation5 [shape = 'u8[8192]{0}', space=vmem, size = 0x2000, scoped, tag = 'input window, operand 1, single buffered']
    #allocation6 [shape = 's32[1]{0}', space=sflag, size = 0x4, scoped, tag = 'scoped memory for tpu_custom_call.1']
    #allocation7 [shape = 'u8[512]{0}', space=vmem, size = 0x400, scoped, tag = 'output window, operand 0, single buffered']
    %7 = vsyncpa [#allocation3], 0
    %8 = vsyncpa [#allocation6], 0
    %9 = vsyncpa [#allocation4], 0
    // Predicated region
    $region2: #{tpu_custom_call.1} parent=1 // pred_check
      _
    $region3: #{tpu_custom_call.1} parent=1 // pred_check_branch
      %11 = sbr.rel (0) target = $region5
    $region4: #{tpu_custom_call.1} parent=1 // pred_region
      %s13 = ssub.s32 256, 256
      %14 = vsyncadd [#allocation3], %s13
      %s15 = sshll.u32 [#allocation2], 4
      %s16 = int_to_ptr.vmem [resolvable:$true] %s15
      %21 = dma.hbm_to_vmem [thread:$0]  %s0, 256, %s16, [#allocation3], 128, 128, 8
    $region5: #{tpu_custom_call.1} parent=1 // pred_fallthru
      _
    // Predicated region
    $region6: #{tpu_custom_call.1} parent=1 // pred_check
      _
    $region7: #{tpu_custom_call.1} parent=1 // pred_check_branch
      %23 = sbr.rel (0) target = $region9
    $region8: #{tpu_custom_call.1} parent=1 // pred_region
      %s25 = ssub.s32 256, 256
      %26 = vsyncadd [#allocation6], %s25
      %s27 = sshll.u32 [#allocation5], 4
      %s28 = int_to_ptr.vmem [resolvable:$true] %s27
      %33 = dma.hbm_to_vmem [thread:$0]  %s1, 256, %s28, [#allocation6], 128, 128, 8
    $region9: #{tpu_custom_call.1} parent=1 // pred_fallthru
      _
    // Predicated region
    $region10: #{tpu_custom_call.1} parent=1 // pred_check
      _
    $region11: #{tpu_custom_call.1} parent=1 // pred_check_branch
      %35 = sbr.rel (0) target = $region13
    $region12: #{tpu_custom_call.1} parent=1 // pred_region
      %36 = dma.done [#allocation3], 256
    $region13: #{tpu_custom_call.1} parent=1 // pred_fallthru
      _
    // Predicated region
    $region14: #{tpu_custom_call.1} parent=1 // pred_check
      _
    $region15: #{tpu_custom_call.1} parent=1 // pred_check_branch
      %38 = sbr.rel (0) target = $region17
    $region16: #{tpu_custom_call.1} parent=1 // pred_region
      %39 = dma.done [#allocation6], 256
    $region17: #{tpu_custom_call.1} parent=1 // pred_fallthru
      _
    %p40 = scmp.eq.s32.totalorder 0, 0
    // Predicated region
    $region18: #{tpu_custom_call.1} parent=1 // pred_check
      %p41 = pneg %p40
    $region19: #{tpu_custom_call.1} parent=1 // pred_check_branch
      %43 = sbr.rel (%p41) target = $region21
    $region20: #{tpu_custom_call.1} parent=1 // pred_region
      %44 = vst [vmem:[#allocation7] sm:$0x1] 0.0
    $region21: #{tpu_custom_call.1} parent=1 // pred_fallthru
      _
    %v45 = vld [vmem:[#allocation2] sm:$0xff]
    %v46 = vld [vmem:[#allocation2 + $0x8] sm:$0xff]
    %v47 = vadd.f32 %v45, 1.2
    %v48 = vadd.f32 %v46, 1.2
    %v49 = vrcp.pop %v47
    %v50 = vmul.f32 %v45, %v49
    %v51 = vrcp.pop %v48
    %v52 = vmul.f32 %v46, %v51
    %v53 = vld [vmem:[#allocation5] sm:$0xff]
    %v54 = vld [vmem:[#allocation5 + $0x8] sm:$0xff]
    %v55 = vmul.f32 %v53, %v50
    %v56 = vmul.f32 %v54, %v52
    %v57 = vld [vmem:[#allocation7] sm:$0x1]
    %v58 = vadd.f32 %v55, %v56
    %v59 = vrot.slane %v58, 4
    %v60 = vadd.f32 %v58, %v59
    %v61 = vrot.slane %v60, 2
    %v62 = vadd.f32 %v60, %v61
    %v63 = vrot.slane %v62, 1
    %v64 = vadd.f32 %v62, %v63
    %v65 = vadd.f32 %v57, %v64
    %66 = vst [vmem:[#allocation7] sm:$0x1] %v65
    // Predicated region
    $region22: #{tpu_custom_call.1} parent=1 // pred_check
      _
    $region23: #{tpu_custom_call.1} parent=1 // pred_check_branch
      %68 = sbr.rel (0) target = $region25
    $region24: #{tpu_custom_call.1} parent=1 // pred_region
      %s70 = ssub.s32 16, 16
      %71 = vsyncadd [#allocation4], %s70
      %s73 = sshll.u32 [#allocation7], 4
      %s74 = int_to_ptr.vmem [resolvable:$true] %s73
      %76 = dma.vmem_to_hbm [thread:$0]  %s74, 16, %s2, [#allocation4]
    $region25: #{tpu_custom_call.1} parent=1 // pred_fallthru
      _
    // Predicated region
    $region26: #{tpu_custom_call.1} parent=1 // pred_check
      _
    $region27: #{tpu_custom_call.1} parent=1 // pred_check_branch
      %78 = sbr.rel (0) target = $region29
    $region28: #{tpu_custom_call.1} parent=1 // pred_region
      %79 = dma.done [#allocation4], 16
    $region29: #{tpu_custom_call.1} parent=1 // pred_fallthru
      _
    %80 = vsyncpa [#allocation3], 1
    %81 = vsyncpa [#allocation6], 1
    %82 = vsyncpa [#allocation4], 1

</llo_original>
